<compile_context>
chip_gen: v7x
topology: tpu7x:2x2x1
jax: 0.10.0
libtpu: 0.0.40
codegen_flags: <defaults>
</compile_context>

<pallas_src>
import functools

import jax
import jax.numpy as jnp
import numpy as np
from jax.experimental import pallas as pl
from jax.experimental.pallas import tpu as pltpu


def _round_up(a, b):
    return (a + b - 1) // b * b


def _vmem_capacity_bytes():
    """Generation-aware VMEM capacity (v5e/v6e: 128 MiB, v7x: 64 MiB per TC)."""
    try:
        info = pltpu.get_tpu_info()
        cap = getattr(info, "vmem_capacity_bytes", None)
        if cap:
            return int(cap)
    except Exception:
        pass
    return 64 * 1024 * 1024  # conservative fallback (v7x per-TensorCore)


def _choose_tile(L, B, C_in, Z, max_tile_l, vmem_cap):
    """Pick an L tile that fits the chip's VMEM and keeps >=2 grid steps when possible."""
    # Conservative per-lane-column VMEM bytes: double-buffered f32 x tile, double-buffered
    # bf16 x_hat tile, plus f32/bf16 intermediates (z, zq, d, casts) of width Z / C_in.
    per_col = 20 * C_in + 16 * Z
    budget = int(vmem_cap * 0.55)                       # leave headroom for compiler scratch
    cap = max(128, min(max_tile_l, budget // per_col) // 128 * 128)
    if L <= cap:
        tile_l, n_l = L, 1                              # full-L block (equals full array dim)
    else:
        tile_l = cap                                    # multiple of 128 -> lane-dense
        n_l = pl.cdiv(L, tile_l)                        # last block may be partial
    # v7x has 2 TensorCores: keep at least 2 parallel grid steps when the problem allows.
    if B * n_l < 2 and L >= 256:
        tile_l = _round_up(pl.cdiv(L, 2), 128)
        n_l = pl.cdiv(L, tile_l)
    masked = (n_l * tile_l != L)
    return tile_l, n_l, masked, per_col


def _ae_kernel(x_ref, we_ref, be_ref, wq_ref, bq_ref, wf_ref, bf_ref,
               xhat_ref, part_ref, *, l_valid, tile_l, masked):
    """One (batch, L-tile) grid step.  Channels on sublanes, length on lanes."""
    x_f32 = x_ref[0]                                    # (C_in, tile_l) f32 straight from HBM
    x = x_f32.astype(jnp.bfloat16)                      # cast on VPU (free slot), no HBM pass

    # encoder: pointwise Conv1d (bf16 MXU, f32 accumulate) + GELU in f32
    z = jnp.dot(we_ref[...], x, preferred_element_type=jnp.float32) + be_ref[...]
    # NOTE: tanh-approximate GELU; PyTorch nn.GELU default is exact erf GELU, but the
    # encoder/decoder are synthetic stand-ins (the torch module takes them as ctor args);
    # the pure-JAX reference below uses the same approximation.
    z = jax.nn.gelu(z, approximate=True)                # (Z, tile_l) f32

    # quant_conv in full f32 ((Z,Z) matmul is tiny) so the loss has no bf16 quant noise.
    zq = jnp.dot(wq_ref[...], z, preferred_element_type=jnp.float32) + bq_ref[...]

    # latent-loss partial: single scalar per tile (valid lanes only).
    d = zq - z
    if masked:  # static flag: only emitted when the last L-tile is partial (OOB lanes)
        lane = jax.lax.broadcasted_iota(jnp.int32, d.shape, dimension=1)
        l0 = pl.program_id(1) * tile_l
        d = jnp.where(l0 + lane < l_valid, d, 0.0)
    part_ref[...] = jnp.sum(d * d).reshape(part_ref.shape)

    # straight-through estimator: forward value of z + (zq - z).detach() is exactly zq.
    # post_quant_conv + decoder folded host-side into one (C_in, Z) matmul.
    xh = jnp.dot(wf_ref[...], zq.astype(wf_ref.dtype),
                 preferred_element_type=jnp.float32) + bf_ref[...]
    xhat_ref[0] = xh.astype(xhat_ref.dtype)             # bf16 store (halves write traffic)


def autoencoder_forward(x_ncl, params, *, max_tile_l=32768):
    """x_ncl: (B, C_in, L) float32, PyTorch Conv1d NCL layout."""
    B, C_in, L = x_ncl.shape
    Z = params["wq"].shape[0]

    vmem_cap = _vmem_capacity_bytes()
    tile_l, nL, masked, per_col = _choose_tile(L, B, C_in, Z, max_tile_l, vmem_cap)

    # fold post_quant_conv into the decoder (both linear, no nonlinearity between):
    #   xhat = Wd @ (Wpq @ z + bpq) + bd = (Wd @ Wpq) @ z + (Wd @ bpq + bd)
    w_fold = params["wd"] @ params["wpq"]                   # (C_in, Z)
    b_fold = params["wd"] @ params["bpq"] + params["bd"]    # (C_in, 1)

    we = params["we"].astype(jnp.bfloat16)
    wf = w_fold.astype(jnp.bfloat16)

    # VMEM limit derived from actual buffer sizes (+ weights + margin), generation-aware cap.
    weight_bytes = 4 * (Z * C_in + Z * Z + C_in * Z + 2 * Z + C_in)
    need = per_col * tile_l + weight_bytes + (4 << 20)
    vmem_limit = int(min(max(need, 32 << 20), 0.8 * vmem_cap))

    kernel = functools.partial(_ae_kernel, l_valid=L, tile_l=tile_l, masked=masked)
    const = lambda b, l: (0, 0)      # resident weights/biases: same block every step
    # NOTE(perf review): pipeline_mode=pl.Buffered(1) on the six resident operands would shave
    # their double-buffers; skipped here (tiny at these channel counts) to keep compile risk low.

    xhat, partials = pl.pallas_call(
        kernel,
        out_shape=(
            jax.ShapeDtypeStruct((B, C_in, L), jnp.bfloat16),      # no pad, no slice, bf16
            jax.ShapeDtypeStruct((B, nL, 1, 1), jnp.float32),      # scalar loss partials
        ),
        grid_spec=pltpu.PrefetchScalarGridSpec(
            num_scalar_prefetch=0,
            grid=(B, nL),
            in_specs=[
                pl.BlockSpec((1, C_in, tile_l), lambda b, l: (b, 0, l)),  # x stream (f32)
                pl.BlockSpec((Z, C_in), const),    # encoder W (bf16)
                pl.BlockSpec((Z, 1), const),       # encoder b (f32)
                pl.BlockSpec((Z, Z), const),       # quant_conv W (f32 for loss fidelity)
                pl.BlockSpec((Z, 1), const),       # quant_conv b (f32)
                pl.BlockSpec((C_in, Z), const),    # folded post_quant_conv + decoder W (bf16)
                pl.BlockSpec((C_in, 1), const),    # folded post_quant_conv + decoder b (f32)
            ],
            out_specs=(
                pl.BlockSpec((1, C_in, tile_l), lambda b, l: (b, 0, l)),  # x_hat (lane-dense)
                pl.BlockSpec((1, 1, 1, 1), lambda b, l: (b, l, 0, 0)),    # loss partials
            ),
        ),
        compiler_params=pltpu.CompilerParams(
            # per-tile loss partials -> no revisited output block -> both grid axes parallel
            # (uses both TensorCores on v7x; harmless on v5e/v6e).
            dimension_semantics=("parallel", "parallel"),
            vmem_limit_bytes=vmem_limit,
        ),
    )(x_ncl, we, params["be"], params["wq"], params["bq"], wf, b_fold)

    latent_loss = jnp.sum(partials) / (B * L * Z)
    return {"predictions": xhat, "other": {"latent_loss": latent_loss}}


def _reference_forward(x_ncl, p):
    """Pure-JAX (f32) reference of the same forward, for a correctness check."""
    def pw_conv(w, b, t):   # w: (O, I), b: (O, 1), t: (B, I, L) -> (B, O, L)
        return jnp.einsum("oi,bil->bol", w, t) + b[None]

    z = jax.nn.gelu(pw_conv(p["we"], p["be"], x_ncl), approximate=True)
    zq = pw_conv(p["wq"], p["bq"], z)
    diff = jnp.mean((zq - z) ** 2)
    z_st = zq                                  # forward value of z + stop_grad(zq - z)
    ph = pw_conv(p["wpq"], p["bpq"], z_st)
    xh = pw_conv(p["wd"], p["bd"], ph)
    return xh, diff


def init_params(key, c_in, z_ch):
    ks = jax.random.split(key, 8)
    s = 0.2
    return {
        "we":  s * jax.random.normal(ks[0], (z_ch, c_in), jnp.float32),   # Conv1d (out, in)
        "be":  s * jax.random.normal(ks[1], (z_ch, 1), jnp.float32),
        "wq":  s * jax.random.normal(ks[2], (z_ch, z_ch), jnp.float32),
        "bq":  s * jax.random.normal(ks[3], (z_ch, 1), jnp.float32),
        "wpq": s * jax.random.normal(ks[4], (z_ch, z_ch), jnp.float32),
        "bpq": s * jax.random.normal(ks[5], (z_ch, 1), jnp.float32),
        "wd":  s * jax.random.normal(ks[6], (c_in, z_ch), jnp.float32),
        "bd":  s * jax.random.normal(ks[7], (c_in, 1), jnp.float32),
    }


if __name__ == "__main__":
    B, C_IN, L, Z_CH = 2, 4, 16, 8   # x: (batch, channels, length) as Conv1d expects

    key = jax.random.PRNGKey(0)
    kx, kp = jax.random.split(key)
    x = jax.random.normal(kx, (B, C_IN, L), jnp.float32)
    params = init_params(kp, C_IN, Z_CH)

    out = autoencoder_forward(x, params)
    x_hat = jax.block_until_ready(out["predictions"])
    latent_loss = jax.block_until_ready(out["other"]["latent_loss"])

    ref_xhat, ref_diff = _reference_forward(x, params)
    assert x_hat.shape == (B, C_IN, L)
    x_hat_f32 = np.asarray(x_hat.astype(jnp.float32))
    assert np.allclose(x_hat_f32, np.asarray(ref_xhat), rtol=2e-2, atol=2e-2)
    assert np.allclose(float(latent_loss), float(ref_diff), rtol=2e-2, atol=2e-2)

    print("KERNEL_OK")
</pallas_src>

<mosaic_0001>
module attributes {stable_mosaic.version = 11 : i64} {
  func.func @_ae_kernel(%arg0: i32, %arg1: i32, %arg2: memref<1x4x16xf32, #tpu.memory_space<vmem>>, %arg3: memref<8x4xbf16, #tpu.memory_space<vmem>>, %arg4: memref<8x1xf32, #tpu.memory_space<vmem>>, %arg5: memref<8x8xf32, #tpu.memory_space<vmem>>, %arg6: memref<8x1xf32, #tpu.memory_space<vmem>>, %arg7: memref<4x8xbf16, #tpu.memory_space<vmem>>, %arg8: memref<4x1xf32, #tpu.memory_space<vmem>>, %arg9: memref<1x4x16xbf16, #tpu.memory_space<vmem>>, %arg10: memref<1x1x1x1xf32, #tpu.memory_space<vmem>>) attributes {dimension_semantics = [#tpu.dimension_semantics<parallel>, #tpu.dimension_semantics<parallel>], iteration_bounds = array<i64: 2, 1>, scalar_prefetch = 0 : i64, scratch_operands = 0 : i64, tpu.core_type = #tpu.core_type<tc>, window_params = [{transform_indices = @transform_0, window_bounds = array<i64: 1, 4, 16>}, {pipeline_mode = #tpu.pipeline_mode<synchronous>, transform_indices = @transform_1, window_bounds = array<i64: 8, 4>}, {pipeline_mode = #tpu.pipeline_mode<synchronous>, transform_indices = @transform_2, window_bounds = array<i64: 8, 1>}, {pipeline_mode = #tpu.pipeline_mode<synchronous>, transform_indices = @transform_3, window_bounds = array<i64: 8, 8>}, {pipeline_mode = #tpu.pipeline_mode<synchronous>, transform_indices = @transform_4, window_bounds = array<i64: 8, 1>}, {pipeline_mode = #tpu.pipeline_mode<synchronous>, transform_indices = @transform_5, window_bounds = array<i64: 4, 8>}, {pipeline_mode = #tpu.pipeline_mode<synchronous>, transform_indices = @transform_6, window_bounds = array<i64: 4, 1>}, {transform_indices = @transform_7, window_bounds = array<i64: 1, 4, 16>}, {transform_indices = @transform_8, window_bounds = array<i64: 1, 1, 1, 1>}]} {
    %c0 = arith.constant 0 : index
    %c0_0 = arith.constant 0 : index
    %c0_1 = arith.constant 0 : index
    %0 = vector.load %arg2[%c0, %c0_0, %c0_1] : memref<1x4x16xf32, #tpu.memory_space<vmem>>, vector<1x4x16xf32>
    %1 = vector.shape_cast %0 : vector<1x4x16xf32> to vector<4x16xf32>
    %2 = arith.truncf %1 : vector<4x16xf32> to vector<4x16xbf16>
    %c0_2 = arith.constant 0 : index
    %c0_3 = arith.constant 0 : index
    %3 = vector.load %arg3[%c0_2, %c0_3] : memref<8x4xbf16, #tpu.memory_space<vmem>>, vector<8x4xbf16>
    %cst = arith.constant dense<0.000000e+00> : vector<8x16xf32>
    %4 = tpu.matmul %3, %2, %cst {dimension_numbers = #tpu.dot_dimension_numbers<[1], [0], [0], [1], [0, 0, 1, 1], [], []>} : vector<8x4xbf16>, vector<4x16xbf16>, vector<8x16xf32> -> vector<8x16xf32>
    %c0_4 = arith.constant 0 : index
    %c0_5 = arith.constant 0 : index
    %5 = vector.load %arg4[%c0_4, %c0_5] : memref<8x1xf32, #tpu.memory_space<vmem>>, vector<8x1xf32>
    %6 = vector.broadcast %5 : vector<8x1xf32> to vector<8x16xf32>
    %7 = arith.addf %4, %6 : vector<8x16xf32>
    %8 = arith.mulf %7, %7 : vector<8x16xf32>
    %9 = arith.mulf %7, %8 : vector<8x16xf32>
    %cst_6 = arith.constant 4.471500e-02 : f32
    %10 = vector.broadcast %cst_6 : f32 to vector<8x16xf32>
    %11 = arith.mulf %10, %9 : vector<8x16xf32>
    %12 = arith.addf %7, %11 : vector<8x16xf32>
    %cst_7 = arith.constant 0.797884583 : f32
    %13 = vector.broadcast %cst_7 : f32 to vector<8x16xf32>
    %14 = arith.mulf %13, %12 : vector<8x16xf32>
    %15 = math.tanh %14 : vector<8x16xf32>
    %cst_8 = arith.constant 1.000000e+00 : f32
    %16 = vector.broadcast %cst_8 : f32 to vector<8x16xf32>
    %17 = arith.addf %16, %15 : vector<8x16xf32>
    %cst_9 = arith.constant 5.000000e-01 : f32
    %18 = vector.broadcast %cst_9 : f32 to vector<8x16xf32>
    %19 = arith.mulf %18, %17 : vector<8x16xf32>
    %20 = arith.mulf %7, %19 : vector<8x16xf32>
    %c0_10 = arith.constant 0 : index
    %c0_11 = arith.constant 0 : index
    %21 = vector.load %arg5[%c0_10, %c0_11] : memref<8x8xf32, #tpu.memory_space<vmem>>, vector<8x8xf32>
    %cst_12 = arith.constant dense<0.000000e+00> : vector<8x16xf32>
    %22 = tpu.matmul %21, %20, %cst_12 {dimension_numbers = #tpu.dot_dimension_numbers<[1], [0], [0], [1], [0, 0, 1, 1], [], []>} : vector<8x8xf32>, vector<8x16xf32>, vector<8x16xf32> -> vector<8x16xf32>
    %c0_13 = arith.constant 0 : index
    %c0_14 = arith.constant 0 : index
    %23 = vector.load %arg6[%c0_13, %c0_14] : memref<8x1xf32, #tpu.memory_space<vmem>>, vector<8x1xf32>
    %24 = vector.broadcast %23 : vector<8x1xf32> to vector<8x16xf32>
    %25 = arith.addf %22, %24 : vector<8x16xf32>
    %26 = arith.subf %25, %20 : vector<8x16xf32>
    %27 = arith.mulf %26, %26 : vector<8x16xf32>
    %28 = vector.shape_cast %27 : vector<8x16xf32> to vector<1x8x16xf32>
    %cst_15 = arith.constant dense<0.000000e+00> : vector<1xf32>
    %29 = vector.multi_reduction <add>, %28, %cst_15 [1, 2] : vector<1x8x16xf32> to vector<1xf32>
    %30 = vector.shape_cast %29 : vector<1xf32> to vector<1x1x1xf32>
    %31 = vector.extract %30[0, 0, 0] : f32 from vector<1x1x1xf32>
    %32 = vector.broadcast %31 : f32 to vector<1x1x1x1xf32>
    %c0_16 = arith.constant 0 : index
    %c0_17 = arith.constant 0 : index
    %c0_18 = arith.constant 0 : index
    %c0_19 = arith.constant 0 : index
    %33 = vector.load %arg10[%c0_16, %c0_17, %c0_18, %c0_19] : memref<1x1x1x1xf32, #tpu.memory_space<vmem>>, vector<1x1x1x1xf32>
    tpu.vector_store %arg10[%c0_16, %c0_17, %c0_18, %c0_19], %32 {strides = array<i32>} : memref<1x1x1x1xf32, #tpu.memory_space<vmem>>, vector<1x1x1x1xf32>,
    %c0_20 = arith.constant 0 : index
    %c0_21 = arith.constant 0 : index
    %34 = vector.load %arg7[%c0_20, %c0_21] : memref<4x8xbf16, #tpu.memory_space<vmem>>, vector<4x8xbf16>
    %35 = arith.truncf %25 : vector<8x16xf32> to vector<8x16xbf16>
    %cst_22 = arith.constant dense<0.000000e+00> : vector<4x16xf32>
    %36 = tpu.matmul %34, %35, %cst_22 {dimension_numbers = #tpu.dot_dimension_numbers<[1], [0], [0], [1], [0, 0, 1, 1], [], []>} : vector<4x8xbf16>, vector<8x16xbf16>, vector<4x16xf32> -> vector<4x16xf32>
    %c0_23 = arith.constant 0 : index
    %c0_24 = arith.constant 0 : index
    %37 = vector.load %arg8[%c0_23, %c0_24] : memref<4x1xf32, #tpu.memory_space<vmem>>, vector<4x1xf32>
    %38 = vector.broadcast %37 : vector<4x1xf32> to vector<4x16xf32>
    %39 = arith.addf %36, %38 : vector<4x16xf32>
    %40 = arith.truncf %39 : vector<4x16xf32> to vector<4x16xbf16>
    %c0_25 = arith.constant 0 : index
    %c0_26 = arith.constant 0 : index
    %c0_27 = arith.constant 0 : index
    %41 = vector.load %arg9[%c0_25, %c0_26, %c0_27] : memref<1x4x16xbf16, #tpu.memory_space<vmem>>, vector<1x4x16xbf16>
    %42 = vector.shape_cast %41 : vector<1x4x16xbf16> to vector<4x16xbf16>
    %43 = vector.shape_cast %40 : vector<4x16xbf16> to vector<1x4x16xbf16>
    tpu.vector_store %arg9[%c0_25, %c0_26, %c0_27], %43 {strides = array<i32>} : memref<1x4x16xbf16, #tpu.memory_space<vmem>>, vector<1x4x16xbf16>,
    return
  }
  func.func @transform_0(%arg0: i32, %arg1: i32) -> (i32, i32, i32) {
    %c0_i32 = arith.constant 0 : i32
    %c0_i32_0 = arith.constant 0 : i32
    return %arg0, %c0_i32, %arg1 : i32, i32, i32
  }
  func.func @transform_1(%arg0: i32, %arg1: i32) -> (i32, i32) {
    %c0_i32 = arith.constant 0 : i32
    %c0_i32_0 = arith.constant 0 : i32
    %c0_i32_1 = arith.constant 0 : i32
    return %c0_i32, %c0_i32_0 : i32, i32
  }
  func.func @transform_2(%arg0: i32, %arg1: i32) -> (i32, i32) {
    %c0_i32 = arith.constant 0 : i32
    %c0_i32_0 = arith.constant 0 : i32
    %c0_i32_1 = arith.constant 0 : i32
    return %c0_i32, %c0_i32_0 : i32, i32
  }
  func.func @transform_3(%arg0: i32, %arg1: i32) -> (i32, i32) {
    %c0_i32 = arith.constant 0 : i32
    %c0_i32_0 = arith.constant 0 : i32
    %c0_i32_1 = arith.constant 0 : i32
    return %c0_i32, %c0_i32_0 : i32, i32
  }
  func.func @transform_4(%arg0: i32, %arg1: i32) -> (i32, i32) {
    %c0_i32 = arith.constant 0 : i32
    %c0_i32_0 = arith.constant 0 : i32
    %c0_i32_1 = arith.constant 0 : i32
    return %c0_i32, %c0_i32_0 : i32, i32
  }
  func.func @transform_5(%arg0: i32, %arg1: i32) -> (i32, i32) {
    %c0_i32 = arith.constant 0 : i32
    %c0_i32_0 = arith.constant 0 : i32
    %c0_i32_1 = arith.constant 0 : i32
    return %c0_i32, %c0_i32_0 : i32, i32
  }
  func.func @transform_6(%arg0: i32, %arg1: i32) -> (i32, i32) {
    %c0_i32 = arith.constant 0 : i32
    %c0_i32_0 = arith.constant 0 : i32
    %c0_i32_1 = arith.constant 0 : i32
    return %c0_i32, %c0_i32_0 : i32, i32
  }
  func.func @transform_7(%arg0: i32, %arg1: i32) -> (i32, i32, i32) {
    %c0_i32 = arith.constant 0 : i32
    %c0_i32_0 = arith.constant 0 : i32
    return %arg0, %c0_i32, %arg1 : i32, i32, i32
  }
  func.func @transform_8(%arg0: i32, %arg1: i32) -> (i32, i32, i32, i32) {
    %c0_i32 = arith.constant 0 : i32
    %c0_i32_0 = arith.constant 0 : i32
    %c0_i32_1 = arith.constant 0 : i32
    return %arg0, %arg1, %c0_i32, %c0_i32_0 : i32, i32, i32, i32
  }
}

</mosaic_0001>

<llo_original>
// kernel: tpu_custom_call.1
$region0: #{tpu_custom_call.1}
  #allocation0 [shape = 'u32[]', space=smem, size = 0x4, offset = 0x4, fixed_abs, tag = 'smem constant byte address 0x4 - core index']
  #allocation1 [shape = 'u32[144,128]{1,0:T(1,128)}', space=vmem, size = 0x12000, scoped, tag = 'internal scratch']
  %s0 = inlined_call_operand.vmem [shape: f32[2,4,16], index: 0, kind: input, shape index: {}]
  %s1 = inlined_call_operand.vmem [shape: bf16[8,4], index: 1, kind: input, shape index: {}]
  %s2 = inlined_call_operand.vmem [shape: f32[8,1], index: 2, kind: input, shape index: {}]
  %s3 = inlined_call_operand.vmem [shape: f32[8,8], index: 3, kind: input, shape index: {}]
  %s4 = inlined_call_operand.vmem [shape: f32[8,1], index: 4, kind: input, shape index: {}]
  %s5 = inlined_call_operand.vmem [shape: bf16[4,8], index: 5, kind: input, shape index: {}]
  %s6 = inlined_call_operand.vmem [shape: f32[4,1], index: 6, kind: input, shape index: {}]
  %s7 = inlined_call_operand.hbm [shape: bf16[2,4,16], index: 7, kind: output, shape index: {0}]
  %s8 = inlined_call_operand.vmem [shape: f32[2,1,1,1], index: 8, kind: output, shape index: {1}]
  %9 = xla_tuple %s7, %s8
  %s10 = sld [smem:[#allocation0]]
  $region69: #{tpu_custom_call.1} parent=0
    _
  %s12 = ssub.s32 1, %s10
  %s13 = scalar_select 0, %s12, %s10
  $region1: #{tpu_custom_call.1} parent=0
    #allocation2 [shape = 'u8[2048]{0}', space=vmem, size = 0x800, scoped, tag = 'output window, operand 0']
    #allocation3 [shape = 's32[2]{0}', space=sflag, size = 0x8, scoped, tag = 'scoped memory for tpu_custom_call.1']
    %14 = vsyncpa [#allocation3], 0
    %s15 = scalar_lea.sflag [#allocation3], 1
    %16 = vsyncpa %s15, 0
    loop: start=0, step=1, limit=4
    $region2: #{tpu_custom_call.1} parent=1 // loop_pre_header
      _
    $region3: #{tpu_custom_call.1} parent=1 // loop_header
      %s18 = sphi 0, %s22
      %p19 = scmp.ge.s32.totalorder %s18, 4
      %s25 = sphi 0, %s37
      %s26 = sphi 0, %s33
      %s27 = sphi 0, %s25
      %s28 = sphi 0, %s26
      %s29 = sphi 0, %s27
      %s30 = sphi 0, %s28
      %s42 = sphi 0, %s44
      %s45 = sphi 0, %s42
      %s46 = sphi 0, %s45
      %s62 = sphi 0, %s46
      %s66 = sphi 0, %s66
      %s68 = sphi 0, %s66
      %s69 = sphi 0, %s68
      %s83 = sphi 0, %s69
      %s87 = sphi 0, %s87
      %s89 = sphi 0, %s87
      %s90 = sphi 0, %s89
      %s104 = sphi 0, %s90
      %s108 = sphi 0, %s108
      %s110 = sphi 0, %s108
      %s111 = sphi 0, %s110
      %s125 = sphi 0, %s111
      %s129 = sphi 0, %s129
      %s131 = sphi 0, %s129
      %s132 = sphi 0, %s131
      %s146 = sphi 0, %s132
      %s150 = sphi 0, %s150
      %s152 = sphi 0, %s150
      %s153 = sphi 0, %s152
      %s167 = sphi 0, %s153
      %s171 = sphi 0, %s171
      %s173 = sphi 0, %s171
      %s174 = sphi 0, %s173
      %s188 = sphi 0, %s174
      %s196 = sphi 0, %s198
      %s199 = sphi 0, %s196
      %s200 = sphi 0, %s199
      %s216 = sphi 0, %s200
      %s224 = sphi 0, %s226
      %s227 = sphi 0, %s224
      %s228 = sphi 0, %s227
      %s244 = sphi 0, %s228
    $region4: #{tpu_custom_call.1} parent=1 // loop_header_branch
      %21 = sbr.rel (%p19) target = $region8
    $region5: #{tpu_custom_call.1} parent=1 // loop_body
      %s23 = ssub.s32 %s18, 1
      %s24 = ssub.s32 %s18, 2
      %s31 = sadd.s32 1, %s26
      %p32 = scmp.ge.s32.totalorder %s31, 1
      %s33 = scalar_select %p32, 0, %s31
      %s34 = sadd.s32 1, %s25
      %s35 = scalar_select %p32, %s34, %s25
      %p36 = scmp.ge.s32.totalorder %s35, 2
      %s37 = scalar_select %p36, 0, %s35
      %s38 = ssub.s32 %s25, %s37
      %s39 = ssub.s32 %s26, %s33
      %s40 = sor.u32 %s38, %s39
      %p41 = scmp.eq.s32.totalorder %s40, 0
      %s43 = sadd.s32 %s42, 1
      %s44 = scalar_select %p41, %s42, %s43
      %p47 = pneg %p41
      %p48 = scmp.eq.s32.totalorder %s18, 1
      %p49 = por %p47, %p48
      %p50 = scmp.ne.s32.totalorder %s42, %s45
      %p51 = scmp.eq.s32.totalorder %s18, 0
      %p52 = por %p50, %p51
      %p53 = scmp.ne.s32.totalorder %s42, %s45
      %p54 = scmp.eq.s32.totalorder %s23, 1
      %p55 = por %p53, %p54
      %p56 = scmp.ne.s32.totalorder %s45, %s46
      %p57 = scmp.eq.s32.totalorder %s23, 0
      %p58 = por %p56, %p57
      %p59 = scmp.ne.s32.totalorder %s45, %s46
      %p60 = scmp.eq.s32.totalorder %s24, 1
      %p61 = por %p59, %p60
      %p63 = scmp.ne.s32.totalorder %s46, %s62
      %p64 = scmp.eq.s32.totalorder %s24, 0
      %p65 = por %p63, %p64
      %s67 = sadd.s32 %s66, 1
      %p70 = scmp.eq.s32.totalorder %s18, 1
      %p71 = scmp.ne.s32.totalorder %s66, %s68
      %p72 = scmp.eq.s32.totalorder %s18, 0
      %p73 = por %p71, %p72
      %p74 = scmp.ne.s32.totalorder %s66, %s68
      %p75 = scmp.eq.s32.totalorder %s23, 1
      %p76 = por %p74, %p75
      %p77 = scmp.ne.s32.totalorder %s68, %s69
      %p78 = scmp.eq.s32.totalorder %s23, 0
      %p79 = por %p77, %p78
      %p80 = scmp.ne.s32.totalorder %s68, %s69
      %p81 = scmp.eq.s32.totalorder %s24, 1
      %p82 = por %p80, %p81
      %p84 = scmp.ne.s32.totalorder %s69, %s83
      %p85 = scmp.eq.s32.totalorder %s24, 0
      %p86 = por %p84, %p85
      %s88 = sadd.s32 %s87, 1
      %p91 = scmp.eq.s32.totalorder %s18, 1
      %p92 = scmp.ne.s32.totalorder %s87, %s89
      %p93 = scmp.eq.s32.totalorder %s18, 0
      %p94 = por %p92, %p93
      %p95 = scmp.ne.s32.totalorder %s87, %s89
      %p96 = scmp.eq.s32.totalorder %s23, 1
      %p97 = por %p95, %p96
      %p98 = scmp.ne.s32.totalorder %s89, %s90
      %p99 = scmp.eq.s32.totalorder %s23, 0
      %p100 = por %p98, %p99
      %p101 = scmp.ne.s32.totalorder %s89, %s90
      %p102 = scmp.eq.s32.totalorder %s24, 1
      %p103 = por %p101, %p102
      %p105 = scmp.ne.s32.totalorder %s90, %s104
      %p106 = scmp.eq.s32.totalorder %s24, 0
      %p107 = por %p105, %p106
      %s109 = sadd.s32 %s108, 1
      %p112 = scmp.eq.s32.totalorder %s18, 1
      %p113 = scmp.ne.s32.totalorder %s108, %s110
      %p114 = scmp.eq.s32.totalorder %s18, 0
      %p115 = por %p113, %p114
      %p116 = scmp.ne.s32.totalorder %s108, %s110
      %p117 = scmp.eq.s32.totalorder %s23, 1
      %p118 = por %p116, %p117
      %p119 = scmp.ne.s32.totalorder %s110, %s111
      %p120 = scmp.eq.s32.totalorder %s23, 0
      %p121 = por %p119, %p120
      %p122 = scmp.ne.s32.totalorder %s110, %s111
      %p123 = scmp.eq.s32.totalorder %s24, 1
      %p124 = por %p122, %p123
      %p126 = scmp.ne.s32.totalorder %s111, %s125
      %p127 = scmp.eq.s32.totalorder %s24, 0
      %p128 = por %p126, %p127
      %s130 = sadd.s32 %s129, 1
      %p133 = scmp.eq.s32.totalorder %s18, 1
      %p134 = scmp.ne.s32.totalorder %s129, %s131
      %p135 = scmp.eq.s32.totalorder %s18, 0
      %p136 = por %p134, %p135
      %p137 = scmp.ne.s32.totalorder %s129, %s131
      %p138 = scmp.eq.s32.totalorder %s23, 1
      %p139 = por %p137, %p138
      %p140 = scmp.ne.s32.totalorder %s131, %s132
      %p141 = scmp.eq.s32.totalorder %s23, 0
      %p142 = por %p140, %p141
      %p143 = scmp.ne.s32.totalorder %s131, %s132
      %p144 = scmp.eq.s32.totalorder %s24, 1
      %p145 = por %p143, %p144
      %p147 = scmp.ne.s32.totalorder %s132, %s146
      %p148 = scmp.eq.s32.totalorder %s24, 0
      %p149 = por %p147, %p148
      %s151 = sadd.s32 %s150, 1
      %p154 = scmp.eq.s32.totalorder %s18, 1
      %p155 = scmp.ne.s32.totalorder %s150, %s152
      %p156 = scmp.eq.s32.totalorder %s18, 0
      %p157 = por %p155, %p156
      %p158 = scmp.ne.s32.totalorder %s150, %s152
      %p159 = scmp.eq.s32.totalorder %s23, 1
      %p160 = por %p158, %p159
      %p161 = scmp.ne.s32.totalorder %s152, %s153
      %p162 = scmp.eq.s32.totalorder %s23, 0
      %p163 = por %p161, %p162
      %p164 = scmp.ne.s32.totalorder %s152, %s153
      %p165 = scmp.eq.s32.totalorder %s24, 1
      %p166 = por %p164, %p165
      %p168 = scmp.ne.s32.totalorder %s153, %s167
      %p169 = scmp.eq.s32.totalorder %s24, 0
      %p170 = por %p168, %p169
      %s172 = sadd.s32 %s171, 1
      %p175 = scmp.eq.s32.totalorder %s18, 1
      %p176 = scmp.ne.s32.totalorder %s171, %s173
      %p177 = scmp.eq.s32.totalorder %s18, 0
      %p178 = por %p176, %p177
      %p179 = scmp.ne.s32.totalorder %s171, %s173
      %p180 = scmp.eq.s32.totalorder %s23, 1
      %p181 = por %p179, %p180
      %p182 = scmp.ne.s32.totalorder %s173, %s174
      %p183 = scmp.eq.s32.totalorder %s23, 0
      %p184 = por %p182, %p183
      %p185 = scmp.ne.s32.totalorder %s173, %s174
      %p186 = scmp.eq.s32.totalorder %s24, 1
      %p187 = por %p185, %p186
      %p189 = scmp.ne.s32.totalorder %s174, %s188
      %p190 = scmp.eq.s32.totalorder %s24, 0
      %p191 = por %p189, %p190
      %s192 = ssub.s32 %s25, %s37
      %s193 = ssub.s32 %s26, %s33
      %s194 = sor.u32 %s192, %s193
      %p195 = scmp.eq.s32.totalorder %s194, 0
      %s197 = sadd.s32 %s196, 1
      %s198 = scalar_select %p195, %s196, %s197
      %p201 = pneg %p195
      %p202 = scmp.eq.s32.totalorder %s18, 1
      %p203 = por %p201, %p202
      %p204 = scmp.ne.s32.totalorder %s196, %s199
      %p205 = scmp.eq.s32.totalorder %s18, 0
      %p206 = por %p204, %p205
      %p207 = scmp.ne.s32.totalorder %s196, %s199
      %p208 = scmp.eq.s32.totalorder %s23, 1
      %p209 = por %p207, %p208
      %p210 = scmp.ne.s32.totalorder %s199, %s200
      %p211 = scmp.eq.s32.totalorder %s23, 0
      %p212 = por %p210, %p211
      %p213 = scmp.ne.s32.totalorder %s199, %s200
      %p214 = scmp.eq.s32.totalorder %s24, 1
      %p215 = por %p213, %p214
      %p217 = scmp.ne.s32.totalorder %s200, %s216
      %p218 = scmp.eq.s32.totalorder %s24, 0
      %p219 = por %p217, %p218
      %s220 = ssub.s32 %s25, %s37
      %s221 = ssub.s32 %s26, %s33
      %s222 = sor.u32 %s220, %s221
      %p223 = scmp.eq.s32.totalorder %s222, 0
      %s225 = sadd.s32 %s224, 1
      %s226 = scalar_select %p223, %s224, %s225
      %p229 = pneg %p223
      %p230 = scmp.eq.s32.totalorder %s18, 1
      %p231 = por %p229, %p230
      %p232 = scmp.ne.s32.totalorder %s224, %s227
      %p233 = scmp.eq.s32.totalorder %s18, 0
      %p234 = por %p232, %p233
      %p235 = scmp.ne.s32.totalorder %s224, %s227
      %p236 = scmp.eq.s32.totalorder %s23, 1
      %p237 = por %p235, %p236
      %p238 = scmp.ne.s32.totalorder %s227, %s228
      %p239 = scmp.eq.s32.totalorder %s23, 0
      %p240 = por %p238, %p239
      %p241 = scmp.ne.s32.totalorder %s227, %s228
      %p242 = scmp.eq.s32.totalorder %s24, 1
      %p243 = por %p241, %p242
      %p245 = scmp.ne.s32.totalorder %s228, %s244
      %p246 = scmp.eq.s32.totalorder %s24, 0
      %p247 = por %p245, %p246
      %p248 = scmp.le.s32.totalorder 1, %s18
      %p249 = scmp.lt.s32.totalorder %s18, 3
      %p250 = pnand %p248, %p249
      %p251 = pneg %p250
      // Predicated region
      $region9: #{tpu_custom_call.1} parent=5 // pred_check
        _
      $region10: #{tpu_custom_call.1} parent=5 // pred_check_branch
        %253 = sbr.rel (%p250) target = $region12
      $region11: #{tpu_custom_call.1} parent=5 // pred_region
        %s254 = ssub.s32 %s18, 1
        // Predicated region
        $region13: #{tpu_custom_call.1} parent=11 // pred_check
          %p255 = pneg %p79
        $region14: #{tpu_custom_call.1} parent=11 // pred_check_branch
          %257 = sbr.rel (%p255) target = $region16
        $region15: #{tpu_custom_call.1} parent=11 // pred_region
          _
        $region16: #{tpu_custom_call.1} parent=11 // pred_fallthru
          _
        // Predicated region
        $region17: #{tpu_custom_call.1} parent=11 // pred_check
          %p258 = pneg %p100
        $region18: #{tpu_custom_call.1} parent=11 // pred_check_branch
          %260 = sbr.rel (%p258) target = $region20
        $region19: #{tpu_custom_call.1} parent=11 // pred_region
          _
        $region20: #{tpu_custom_call.1} parent=11 // pred_fallthru
          _
        // Predicated region
        $region21: #{tpu_custom_call.1} parent=11 // pred_check
          %p261 = pneg %p121
        $region22: #{tpu_custom_call.1} parent=11 // pred_check_branch
          %263 = sbr.rel (%p261) target = $region24
        $region23: #{tpu_custom_call.1} parent=11 // pred_region
          _
        $region24: #{tpu_custom_call.1} parent=11 // pred_fallthru
          _
        // Predicated region
        $region25: #{tpu_custom_call.1} parent=11 // pred_check
          %p264 = pneg %p142
        $region26: #{tpu_custom_call.1} parent=11 // pred_check_branch
          %266 = sbr.rel (%p264) target = $region28
        $region27: #{tpu_custom_call.1} parent=11 // pred_region
          _
        $region28: #{tpu_custom_call.1} parent=11 // pred_fallthru
          _
        // Predicated region
        $region29: #{tpu_custom_call.1} parent=11 // pred_check
          %p267 = pneg %p163
        $region30: #{tpu_custom_call.1} parent=11 // pred_check_branch
          %269 = sbr.rel (%p267) target = $region32
        $region31: #{tpu_custom_call.1} parent=11 // pred_region
          _
        $region32: #{tpu_custom_call.1} parent=11 // pred_fallthru
          _
        // Predicated region
        $region33: #{tpu_custom_call.1} parent=11 // pred_check
          %p270 = pneg %p184
        $region34: #{tpu_custom_call.1} parent=11 // pred_check_branch
          %272 = sbr.rel (%p270) target = $region36
        $region35: #{tpu_custom_call.1} parent=11 // pred_region
          _
        $region36: #{tpu_custom_call.1} parent=11 // pred_fallthru
          _
      $region12: #{tpu_custom_call.1} parent=5 // pred_fallthru
        _
      %p273 = scmp.lt.s32.totalorder %s18, 2
      // Predicated region
      $region37: #{tpu_custom_call.1} parent=5 // pred_check
        %p274 = pneg %p273
      $region38: #{tpu_custom_call.1} parent=5 // pred_check_branch
        %276 = sbr.rel (%p274) target = $region40
      $region39: #{tpu_custom_call.1} parent=5 // pred_region
        // Predicated region
        $region41: #{tpu_custom_call.1} parent=39 // pred_check
          %p277 = pneg %p52
        $region42: #{tpu_custom_call.1} parent=39 // pred_check_branch
          %279 = sbr.rel (%p277) target = $region44
        $region43: #{tpu_custom_call.1} parent=39 // pred_region
          %p280 = scmp.lt.s32.totalorder %s25, 1
          %s281 = scalar_select %p280, %s25, 1
          %p282 = scmp.lt.s32.totalorder %s26, 0
          %s283 = scalar_select %p282, %s26, 0
          %s284 = sadd.s32 %s283, %s281
          %s285 = smul.addr %s284, 4
          %s286 = scalar_lea.vmem %s0, %s285
        $region44: #{tpu_custom_call.1} parent=39 // pred_fallthru
          _
      $region40: #{tpu_custom_call.1} parent=5 // pred_fallthru
        _
      %p287 = scmp.le.s32.totalorder 1, %s18
      %p288 = scmp.lt.s32.totalorder %s18, 3
      %p289 = pnand %p287, %p288
      %p290 = pneg %p289
      // Predicated region
      $region45: #{tpu_custom_call.1} parent=5 // pred_check
        _
      $region46: #{tpu_custom_call.1} parent=5 // pred_check_branch
        %292 = sbr.rel (%p289) target = $region48
      $region47: #{tpu_custom_call.1} parent=5 // pred_region
        %s293 = ssub.s32 %s18, 1
        %p294 = scmp.lt.s32.totalorder %s27, 1
        %s295 = scalar_select %p294, %s27, 1
        %p296 = scmp.lt.s32.totalorder %s28, 0
        %s297 = scalar_select %p296, %s28, 0
        %s298 = sadd.s32 %s297, %s295
        %s299 = smul.addr %s298, 4
        %s300 = scalar_lea.vmem %s0, %s299
        %p301 = pneg %p58
        %p302 = pneg %p55
        %p303 = pneg %p79
        %p304 = pneg %p76
        %p305 = pneg %p100
        %p306 = pneg %p97
        %p307 = pneg %p121
        %p308 = pneg %p118
        %p309 = pneg %p142
        %p310 = pneg %p139
        %p311 = pneg %p163
        %p312 = pneg %p160
        %p313 = pneg %p184
        %p314 = pneg %p181
        %p315 = pneg %p212
        %p316 = pneg %p209
        %s317 = sand.u32 %s199, 1
        %s318 = scalar_lea.sflag [#allocation3], %s317
        %s319 = sand.u32 %s199, 1
        %s320 = smul.addr %s319, 2
        %s321 = scalar_lea.vmem [#allocation2], %s320
        %p322 = pneg %p240
        %p323 = pneg %p237
        %p324 = scmp.lt.s32.totalorder %s27, 1
        %s325 = scalar_select %p324, %s27, 1
        %p326 = scmp.lt.s32.totalorder %s28, 0
        %s327 = scalar_select %p326, %s28, 0
        %s328 = sadd.s32 %s327, %s325
        %s329 = scalar_lea.vmem %s8, %s328
        %p330 = scmp.lt.s32.totalorder %s27, 1
        %s331 = scalar_select %p330, %s27, 1
        %p332 = scmp.lt.s32.totalorder %s28, 0
        %s333 = scalar_select %p332, %s28, 0
        %s334 = sadd.s32 %s333, %s331
        %s335 = smul.addr %s334, 4
        %s336 = scalar_lea.vmem %s0, %s335
        %p337 = scmp.lt.s32.totalorder %s27, 1
        %s338 = scalar_select %p337, %s27, 1
        %p339 = scmp.lt.s32.totalorder %s28, 0
        %s340 = scalar_select %p339, %s28, 0
        %s341 = sadd.s32 %s340, %s338
        %s342 = scalar_lea.vmem %s8, %s341
        %v344 = vld [vmem:[%s336] sm:$0xf]
        %v345 = vpack.c.bf16 %v344, %v344
        %v346 = vld [vmem:[%s1] sm:$0xf]
        %v347 = vld [vmem:[%s2] sm:$0xff]
        %349 = vset.pattern.permute.xlu0 0
        %350 = vperm.xlu0 %349, %v347
        %v351 = vpop.permute.xlu0 %350
        %vm353 = vcmask 31744
        %v355 = vsel %vm353, %v346, 0
        %vm357 = vcmask 1041408
        %v359 = vsel %vm357, %v345, 0
        %361 = vmatprep.subr.bf16.mxu0 0
        %362 = vmatpush1.bf16.msra.mxu0 %v359
        %363 = vmatprep.subr.bf16.mxu0 0
        %364 = vmatpush1.bf16.msra.mxu0 0
        %365 = vmatprep.subr.bf16.mxu0 0
        %366 = vmatpush1.bf16.msra.mxu0 0
        %367 = vmatprep.subr.bf16.mxu0 0
        %368 = vmatpush1.bf16.msra.mxu0 0
        %369 = vmatprep.subr.bf16.mxu0 0
        %370 = vmatpush1.bf16.msra.mxu0 0
        %371 = vmatprep.subr.bf16.mxu0 0
        %372 = vmatpush1.bf16.msra.mxu0 0
        %373 = vmatprep.subr.bf16.mxu0 0
        %374 = vmatpush1.bf16.msra.mxu0 0
        %375 = vmatprep.subr.bf16.mxu0 0
        %376 = vmatpush1.bf16.msra.mxu0 0
        %377 = vmatprep.subr.bf16.mxu0 0
        %378 = vmatpush1.bf16.msra.mxu0 0
        %379 = vmatprep.subr.bf16.mxu0 0
        %380 = vmatpush1.bf16.msra.mxu0 0
        %381 = vmatprep.subr.bf16.mxu0 0
        %382 = vmatpush1.bf16.msra.mxu0 0
        %383 = vmatprep.subr.bf16.mxu0 0
        %384 = vmatpush1.bf16.msra.mxu0 0
        %385 = vmatprep.subr.bf16.mxu0 0
        %386 = vmatpush1.bf16.msra.mxu0 0
        %387 = vmatprep.subr.bf16.mxu0 0
        %388 = vmatpush1.bf16.msra.mxu0 0
        %389 = vmatprep.subr.bf16.mxu0 0
        %390 = vmatpush1.bf16.msra.mxu0 0
        %391 = vmatprep.subr.bf16.mxu0 0
        %392 = vmatpush1.bf16.msra.mxu0 0
        %393 = vmatprep.mubr.bf16.mxu0 0
        %394 = vmatmul.mubr.bf16.gmra.mrb[0].mxu0 %v355
        %v395 = vpop.f32.mrb[0].mxu0
        %v396 = vadd.f32 %v351, %v395
        %v397 = vpop.f32.mrb[0].mxu0
        %v398 = vpop.f32.mrb[0].mxu0
        %v399 = vpop.f32.mrb[0].mxu0
        %400 = vdwg.mxu0
        %v401 = vmul.f32 %v396, %v396
        %v402 = vmul.f32 %v396, %v401
        %v403 = vmul.f32 %v402, 0.044715
        %v404 = vadd.f32 %v396, %v403
        %v405 = vmul.f32 %v404, 0.7978846
        %v406 = vtanh.pop %v405
        %v407 = vadd.f32 %v406, 1.0
        %v408 = vmul.f32 %v407, 0.5
        %v409 = vmul.f32 %v396, %v408
        %v410 = vld [vmem:[%s3] sm:$0xff]
        %v411 = vld [vmem:[%s4] sm:$0xff]
        %413 = vset.pattern.permute.xlu0 0
        %414 = vperm.xlu0 %413, %v411
        %v415 = vpop.permute.xlu0 %414
        %vm417 = vcmask 64512
        %v419 = vsel %vm417, %v410, 0
        %421 = vmatprep.subr.mxu0 0.0
        %422 = vmatpush1.msra.mxu0 %v409
        %423 = vmatprep.subr.mxu0 0.0
        %424 = vmatpush1.msra.mxu0 0.0
        %425 = vmatprep.subr.mxu0 0.0
        %426 = vmatpush1.msra.mxu0 0.0
        %427 = vmatprep.subr.mxu0 0.0
        %428 = vmatpush1.msra.mxu0 0.0
        %429 = vmatprep.subr.mxu0 0.0
        %430 = vmatpush1.msra.mxu0 0.0
        %431 = vmatprep.subr.mxu0 0.0
        %432 = vmatpush1.msra.mxu0 0.0
        %433 = vmatprep.subr.mxu0 0.0
        %434 = vmatpush1.msra.mxu0 0.0
        %435 = vmatprep.subr.mxu0 0.0
        %436 = vmatpush1.msra.mxu0 0.0
        %437 = vmatprep.subr.mxu0 0.0
        %438 = vmatpush1.msra.mxu0 0.0
        %439 = vmatprep.subr.mxu0 0.0
        %440 = vmatpush1.msra.mxu0 0.0
        %441 = vmatprep.subr.mxu0 0.0
        %442 = vmatpush1.msra.mxu0 0.0
        %443 = vmatprep.subr.mxu0 0.0
        %444 = vmatpush1.msra.mxu0 0.0
        %445 = vmatprep.subr.mxu0 0.0
        %446 = vmatpush1.msra.mxu0 0.0
        %447 = vmatprep.subr.mxu0 0.0
        %448 = vmatpush1.msra.mxu0 0.0
        %449 = vmatprep.subr.mxu0 0.0
        %450 = vmatpush1.msra.mxu0 0.0
        %451 = vmatprep.subr.mxu0 0.0
        %452 = vmatpush1.msra.mxu0 0.0
        %453 = vmatprep.subr.mxu0 0.0
        %454 = vmatpush1.msra.mxu0 0.0
        %455 = vmatprep.subr.mxu0 0.0
        %456 = vmatpush1.msra.mxu0 0.0
        %457 = vmatprep.subr.mxu0 0.0
        %458 = vmatpush1.msra.mxu0 0.0
        %459 = vmatprep.subr.mxu0 0.0
        %460 = vmatpush1.msra.mxu0 0.0
        %461 = vmatprep.subr.mxu0 0.0
        %462 = vmatpush1.msra.mxu0 0.0
        %463 = vmatprep.subr.mxu0 0.0
        %464 = vmatpush1.msra.mxu0 0.0
        %465 = vmatprep.subr.mxu0 0.0
        %466 = vmatpush1.msra.mxu0 0.0
        %467 = vmatprep.subr.mxu0 0.0
        %468 = vmatpush1.msra.mxu0 0.0
        %469 = vmatprep.subr.mxu0 0.0
        %470 = vmatpush1.msra.mxu0 0.0
        %471 = vmatprep.subr.mxu0 0.0
        %472 = vmatpush1.msra.mxu0 0.0
        %473 = vmatprep.subr.mxu0 0.0
        %474 = vmatpush1.msra.mxu0 0.0
        %475 = vmatprep.subr.mxu0 0.0
        %476 = vmatpush1.msra.mxu0 0.0
        %477 = vmatprep.subr.mxu0 0.0
        %478 = vmatpush1.msra.mxu0 0.0
        %479 = vmatprep.subr.mxu0 0.0
        %480 = vmatpush1.msra.mxu0 0.0
        %481 = vmatprep.subr.mxu0 0.0
        %482 = vmatpush1.msra.mxu0 0.0
        %483 = vmatprep.subr.mxu0 0.0
        %484 = vmatpush1.msra.mxu0 0.0
        %485 = vmatprep.mubr.f32.mxu0 0.0
        %486 = vmatmul.mubr.f32.gmra.mrb[0].mxu0 %v419
        %v487 = vpop.f32.mrb[0].mxu0
        %v488 = vadd.f32 %v415, %v487
        %v489 = vpop.f32.mrb[0].mxu0
        %490 = vdwg.mxu0
        %v491 = vsub.f32 %v488, %v409
        %v492 = vmul.f32 %v491, %v491
        %vm493 = vcmask 130048
        %v494 = vsel %vm493, %v492, 0.0
        %495 = vadd.xlane.f32.xlu0 %v494
        %v496 = vpop.xlane.xlu0 %495
        %v497 = vrot.slane %v496, 4
        %v498 = vadd.f32 %v496, %v497
        %v499 = vrot.slane %v498, 2
        %v500 = vadd.f32 %v498, %v499
        %v501 = vrot.slane %v500, 1
        %v502 = vadd.f32 %v500, %v501
        %s503 = vtos %v502
        %v504 = vstv %s503
        %vm505 = vcmask 0
        %506 = vst.msk [vmem:[%s342] sm:$0x1] %vm505, %v504
        %v507 = vld [vmem:[%s5] sm:$0x3]
        %v508 = vpack.c.bf16 %v488, %v488
        %v509 = vld [vmem:[%s6] sm:$0xf]
        %511 = vset.pattern.permute.xlu0 0
        %512 = vperm.xlu0 %511, %v509
        %v513 = vpop.permute.xlu0 %512
        %v516 = vsel %vm417, %v507, 0
        %vm518 = vcmask 1043456
        %v520 = vsel %vm518, %v508, 0
        %522 = vmatprep.subr.bf16.mxu0 0
        %523 = vmatpush1.bf16.msra.mxu0 %v520
        %524 = vmatprep.subr.bf16.mxu0 0
        %525 = vmatpush1.bf16.msra.mxu0 0
        %526 = vmatprep.subr.bf16.mxu0 0
        %527 = vmatpush1.bf16.msra.mxu0 0
        %528 = vmatprep.subr.bf16.mxu0 0
        %529 = vmatpush1.bf16.msra.mxu0 0
        %530 = vmatprep.subr.bf16.mxu0 0
        %531 = vmatpush1.bf16.msra.mxu0 0
        %532 = vmatprep.subr.bf16.mxu0 0
        %533 = vmatpush1.bf16.msra.mxu0 0
        %534 = vmatprep.subr.bf16.mxu0 0
        %535 = vmatpush1.bf16.msra.mxu0 0
        %536 = vmatprep.subr.bf16.mxu0 0
        %537 = vmatpush1.bf16.msra.mxu0 0
        %538 = vmatprep.subr.bf16.mxu0 0
        %539 = vmatpush1.bf16.msra.mxu0 0
        %540 = vmatprep.subr.bf16.mxu0 0
        %541 = vmatpush1.bf16.msra.mxu0 0
        %542 = vmatprep.subr.bf16.mxu0 0
        %543 = vmatpush1.bf16.msra.mxu0 0
        %544 = vmatprep.subr.bf16.mxu0 0
        %545 = vmatpush1.bf16.msra.mxu0 0
        %546 = vmatprep.subr.bf16.mxu0 0
        %547 = vmatpush1.bf16.msra.mxu0 0
        %548 = vmatprep.subr.bf16.mxu0 0
        %549 = vmatpush1.bf16.msra.mxu0 0
        %550 = vmatprep.subr.bf16.mxu0 0
        %551 = vmatpush1.bf16.msra.mxu0 0
        %552 = vmatprep.subr.bf16.mxu0 0
        %553 = vmatpush1.bf16.msra.mxu0 0
        %554 = vmatprep.mubr.bf16.mxu0 0
        %555 = vmatmul.mubr.bf16.gmra.mrb[0].mxu0 %v516
        %v556 = vpop.f32.mrb[0].mxu0
        %v557 = vadd.f32 %v513, %v556
        %v558 = vpop.f32.mrb[0].mxu0
        %v559 = vpop.f32.mrb[0].mxu0
        %v560 = vpop.f32.mrb[0].mxu0
        %561 = vdwg.mxu0
        %v562 = vpack.c.bf16 %v557, %v557
        %vm563 = vcmask 123904
        %564 = vst.msk [vmem:[%s321] sm:$0x3] %vm563, %v562
        %s565 = sand.u32 %s199, 1
        %s566 = scalar_lea.sflag [#allocation3], %s565
        %s567 = sand.u32 %s199, 1
        %s568 = smul.addr %s567, 2
        %s569 = scalar_lea.vmem [#allocation2], %s568
        %p570 = scmp.lt.s32.totalorder %s27, 1
        %s571 = scalar_select %p570, %s27, 1
        %p572 = scmp.lt.s32.totalorder %s28, 0
        %s573 = scalar_select %p572, %s28, 0
        %s574 = sadd.s32 %s573, %s571
        %s575 = scalar_lea.vmem %s8, %s574
        // Predicated region
        $region49: #{tpu_custom_call.1} parent=47 // pred_check
          %p576 = pneg %p209
        $region50: #{tpu_custom_call.1} parent=47 // pred_check_branch
          %578 = sbr.rel (%p576) target = $region52
        $region51: #{tpu_custom_call.1} parent=47 // pred_region
          %s580 = ssub.s32 32, 32
          %581 = vsyncadd %s566, %s580
          %s582 = sadd.s32 %s28, %s27
          %s583 = smul.addr %s582, 32
          %s584 = scalar_lea.hbm %s7, %s583
          %s586 = sshll.u32 %s569, 4
          %s587 = int_to_ptr.vmem [resolvable:$true] %s586
          %589 = dma.vmem_to_hbm [thread:$0]  %s587, 32, %s584, %s566
        $region52: #{tpu_custom_call.1} parent=47 // pred_fallthru
          _
        // Predicated region
        $region53: #{tpu_custom_call.1} parent=47 // pred_check
          %p590 = pneg %p237
        $region54: #{tpu_custom_call.1} parent=47 // pred_check_branch
          %592 = sbr.rel (%p590) target = $region56
        $region55: #{tpu_custom_call.1} parent=47 // pred_region
          _
        $region56: #{tpu_custom_call.1} parent=47 // pred_fallthru
          _
      $region48: #{tpu_custom_call.1} parent=5 // pred_fallthru
        _
      %p593 = scmp.le.s32.totalorder 2, %s18
      // Predicated region
      $region57: #{tpu_custom_call.1} parent=5 // pred_check
        %p594 = pneg %p593
      $region58: #{tpu_custom_call.1} parent=5 // pred_check_branch
        %596 = sbr.rel (%p594) target = $region60
      $region59: #{tpu_custom_call.1} parent=5 // pred_region
        %s597 = ssub.s32 %s18, 2
        // Predicated region
        $region61: #{tpu_custom_call.1} parent=59 // pred_check
          %p598 = pneg %p215
        $region62: #{tpu_custom_call.1} parent=59 // pred_check_branch
          %600 = sbr.rel (%p598) target = $region64
        $region63: #{tpu_custom_call.1} parent=59 // pred_region
          %s601 = sand.u32 %s200, 1
          %s602 = scalar_lea.sflag [#allocation3], %s601
          %s603 = sand.u32 %s200, 1
          %s604 = smul.addr %s603, 2
          %s605 = scalar_lea.vmem [#allocation2], %s604
          %606 = dma.done %s602, 32
        $region64: #{tpu_custom_call.1} parent=59 // pred_fallthru
          _
        // Predicated region
        $region65: #{tpu_custom_call.1} parent=59 // pred_check
          %p607 = pneg %p243
        $region66: #{tpu_custom_call.1} parent=59 // pred_check_branch
          %609 = sbr.rel (%p607) target = $region68
        $region67: #{tpu_custom_call.1} parent=59 // pred_region
          %p610 = scmp.lt.s32.totalorder %s29, 1
          %s611 = scalar_select %p610, %s29, 1
          %p612 = scmp.lt.s32.totalorder %s30, 0
          %s613 = scalar_select %p612, %s30, 0
          %s614 = sadd.s32 %s613, %s611
          %s615 = scalar_lea.vmem %s8, %s614
        $region68: #{tpu_custom_call.1} parent=59 // pred_fallthru
          _
      $region60: #{tpu_custom_call.1} parent=5 // pred_fallthru
        _
    $region6: #{tpu_custom_call.1} parent=1 // loop_footer
      %s22 = sadd.s32 1, %s18
    $region7: #{tpu_custom_call.1} parent=1 // loop_footer_branch
      %17 = sbr.rel target = $region3
    $region8: #{tpu_custom_call.1} parent=1 // loop_exit
      _
    %616 = vsyncpa [#allocation3], 1
    %s617 = scalar_lea.sflag [#allocation3], 1
    %618 = vsyncpa %s617, 1

</llo_original>
